<compile_context>
chip_gen: v7x
topology: tpu7x:2x2x1
jax: 0.10.0
libtpu: 0.0.40
codegen_flags: <defaults>
</compile_context>

<pallas_src>
import jax
import jax.numpy as jnp
from jax.experimental import pallas as pl
from jax.experimental.pallas import tpu as pltpu


def make_rnn_kernel(S, BP, DP, H, B, C):
    """Kernel with static seq-len / padded-batch / dims baked in."""
    W_IN0 = 0          # rows [0, DP)        : [W_ih^T ; (b_ih+b_hh) row ; zeros]
    W_HH0 = DP         # rows [DP, DP+H)     : W_hh^T
    W_OUT0 = DP + H    # rows [DP+H, DP+2H)  : W_out^T (cols >= C zero)
    B_OUT = DP + 2 * H  # row DP+2H          : b_out (cols >= C set to -1e9)

    def rnn_kernel(x_ref, w_ref, out_ref):
        # x_ref : (S*BP, DP)  time-major, batch padded to BP, ones col at D
        # w_ref : (DP+2H+8, H) packed parameters (see offsets above)
        # out_ref: (B, C) softmax probabilities

        # Input projection hoisted out of the recurrence; bias folded into the
        # matmul via the ones column of x and the bias row of the weight block.
        xw = jnp.dot(x_ref[...], w_ref[W_IN0:W_IN0 + DP, :],
                     preferred_element_type=jnp.float32)        # (S*BP, H)

        whh = w_ref[W_HH0:W_HH0 + H, :]                         # (H, H), vreg-resident

        # Recurrence, fully unrolled (S small & static).  h_0 = 0 => first
        # step needs no h @ W_hh^T matmul.  All xw slices are 8-sublane aligned.
        # TODO(synk): keep W_hh resident in MXU weight registers across the
        # unrolled loop via pltpu.matmul_push_rhs/matmul_acc_lhs/matmul_pop.
        h = jnp.tanh(xw[0:BP, :])
        acc = h
        for t in range(1, S):
            pre = xw[t * BP:(t + 1) * BP, :] + jnp.dot(
                h, whh, preferred_element_type=jnp.float32)
            h = jnp.tanh(pre)
            acc = acc + h

        # logits = sum_t(h_t) @ W^T + b ; padded class columns get -1e9 bias
        # so the masked softmax over the padded width is exact.
        logits = (jnp.dot(acc, w_ref[W_OUT0:W_OUT0 + H, :],
                          preferred_element_type=jnp.float32)
                  + w_ref[B_OUT:B_OUT + 1, :])                  # (BP, H)
        m = jnp.max(logits, axis=-1, keepdims=True)
        e = jnp.exp(logits - m)
        s = jnp.sum(e, axis=-1, keepdims=True)
        probs = e * pl.reciprocal(s, approx=True)               # EUP slot, ~free
        out_ref[...] = probs[0:B, 0:C]

    return rnn_kernel


def pack_weights(w_ih, w_hh, b_ih, b_hh, w_out, b_out, DP, H, C):
    """One-time host-side packing of all parameters into a single array.

    Cache the result if calling the kernel repeatedly."""
    rows = DP + 2 * H + 8                       # 32 + 64 + 8 = 104 (8-aligned)
    D = w_ih.shape[1]
    w_pack = jnp.zeros((rows, H), jnp.float32)
    w_pack = w_pack.at[0:D, :].set(w_ih.T)                      # W_ih^T
    w_pack = w_pack.at[D, :].set(b_ih + b_hh)                   # folded rec. bias
    w_pack = w_pack.at[DP:DP + H, :].set(w_hh.T)                # W_hh^T
    w_pack = w_pack.at[DP + H:DP + 2 * H, 0:C].set(w_out.T)     # W_out^T (padded cols 0)
    w_pack = w_pack.at[DP + 2 * H, 0:C].set(b_out)              # b_out
    w_pack = w_pack.at[DP + 2 * H, C:].set(-1e9)                # mask padded logits
    return w_pack


def pack_inputs(x, DP, BP):
    """Pad batch -> BP, append ones column (bias), pad input dim -> DP."""
    S, B, D = x.shape
    x_aug = jnp.zeros((S, BP, DP), jnp.float32)
    x_aug = x_aug.at[:, :B, :D].set(x)
    x_aug = x_aug.at[:, :, D].set(1.0)          # ones column for folded bias
    return x_aug.reshape(S * BP, DP)


def rnn_forward(x, w_ih, w_hh, b_ih, b_hh, w_out, b_out):
    """x: (seq_len, batch, input_dim) float32 -> (batch, 5) float32 probs."""
    S, B, D = x.shape
    H = w_ih.shape[0]
    C = w_out.shape[0]
    BP = 8                                      # batch padded to one sublane group
    DP = 32                                     # input dim (+1 bias col) padded to 32

    x2d = pack_inputs(x, DP, BP)                                  # (S*BP, DP)
    w_pack = pack_weights(w_ih, w_hh, b_ih, b_hh, w_out, b_out,
                          DP, H, C)                               # (104, H)

    vmem_spec = pl.BlockSpec(memory_space=pltpu.MemorySpace.VMEM)

    return pl.pallas_call(
        make_rnn_kernel(S, BP, DP, H, B, C),
        out_shape=jax.ShapeDtypeStruct((B, C), jnp.float32),
        in_specs=[vmem_spec, vmem_spec],        # 2 DMAs total (few KiB)
        out_specs=vmem_spec,
    )(x2d, w_pack)


def reference_forward(x, w_ih, w_hh, b_ih, b_hh, w_out, b_out):
    """Pure-JAX reference matching the PyTorch module's forward()."""
    S, B, D = x.shape
    H = w_ih.shape[0]
    h = jnp.zeros((B, H), jnp.float32)
    acc = jnp.zeros((B, H), jnp.float32)
    for t in range(S):
        h = jnp.tanh(x[t] @ w_ih.T + b_ih + h @ w_hh.T + b_hh)
        acc = acc + h
    logits = acc @ w_out.T + b_out
    return jax.nn.softmax(logits, axis=-1)


if __name__ == "__main__":
    # Shapes consistent with the module: seq=8, batch=2, input_dim=16, h=32, 5 classes.
    S, B, D, H, C = 8, 2, 16, 32, 5

    key = jax.random.PRNGKey(0)
    kx, k1, k2, k3, k4, k5, k6 = jax.random.split(key, 7)

    # Deterministic parameter init, PyTorch-style uniform(-1/sqrt(h), 1/sqrt(h)).
    bound = 1.0 / jnp.sqrt(jnp.float32(H))
    w_ih = jax.random.uniform(k1, (H, D), jnp.float32, -bound, bound)
    w_hh = jax.random.uniform(k2, (H, H), jnp.float32, -bound, bound)
    b_ih = jax.random.uniform(k3, (H,), jnp.float32, -bound, bound)
    b_hh = jax.random.uniform(k4, (H,), jnp.float32, -bound, bound)
    w_out = jax.random.uniform(k5, (C, H), jnp.float32, -bound, bound)
    b_out = jax.random.uniform(k6, (C,), jnp.float32, -bound, bound)

    x = jax.random.normal(kx, (S, B, D), jnp.float32)

    probs = rnn_forward(x, w_ih, w_hh, b_ih, b_hh, w_out, b_out)
    probs = jax.block_until_ready(probs)

    ref = reference_forward(x, w_ih, w_hh, b_ih, b_hh, w_out, b_out)
    assert probs.shape == (B, C)
    # Tolerance loosened slightly for the EUP approximate reciprocal in softmax.
    assert jnp.allclose(probs, ref, atol=1e-3, rtol=1e-3)

    print("KERNEL_OK")
</pallas_src>

<mosaic_0001>
module attributes {stable_mosaic.version = 11 : i64} {
  func.func @rnn_kernel(%arg0: memref<64x32xf32, #tpu.memory_space<vmem>>, %arg1: memref<104x32xf32, #tpu.memory_space<vmem>>, %arg2: memref<2x5xf32, #tpu.memory_space<vmem>>) attributes {dimension_semantics = [], scalar_prefetch = 0 : i64, scratch_operands = 0 : i64, tpu.core_type = #tpu.core_type<tc>} {
    %c0 = arith.constant 0 : index
    %c0_0 = arith.constant 0 : index
    %0 = vector.load %arg0[%c0, %c0_0] : memref<64x32xf32, #tpu.memory_space<vmem>>, vector<64x32xf32>
    %c0_1 = arith.constant 0 : index
    %c0_2 = arith.constant 0 : index
    %1 = vector.load %arg1[%c0_1, %c0_2] : memref<104x32xf32, #tpu.memory_space<vmem>>, vector<32x32xf32>
    %cst = arith.constant dense<0.000000e+00> : vector<64x32xf32>
    %2 = tpu.matmul %0, %1, %cst {dimension_numbers = #tpu.dot_dimension_numbers<[1], [0], [0], [1], [0, 0, 1, 1], [], []>} : vector<64x32xf32>, vector<32x32xf32>, vector<64x32xf32> -> vector<64x32xf32>
    %c32 = arith.constant 32 : index
    %c0_3 = arith.constant 0 : index
    %3 = vector.load %arg1[%c32, %c0_3] : memref<104x32xf32, #tpu.memory_space<vmem>>, vector<32x32xf32>
    %4 = vector.extract_strided_slice %2 {offsets = [0, 0], sizes = [8, 32], strides = [1, 1]} : vector<64x32xf32> to vector<8x32xf32>
    %5 = math.tanh %4 : vector<8x32xf32>
    %6 = vector.extract_strided_slice %2 {offsets = [8, 0], sizes = [8, 32], strides = [1, 1]} : vector<64x32xf32> to vector<8x32xf32>
    %cst_4 = arith.constant dense<0.000000e+00> : vector<8x32xf32>
    %7 = tpu.matmul %5, %3, %cst_4 {dimension_numbers = #tpu.dot_dimension_numbers<[1], [0], [0], [1], [0, 0, 1, 1], [], []>} : vector<8x32xf32>, vector<32x32xf32>, vector<8x32xf32> -> vector<8x32xf32>
    %8 = arith.addf %6, %7 : vector<8x32xf32>
    %9 = math.tanh %8 : vector<8x32xf32>
    %10 = arith.addf %5, %9 : vector<8x32xf32>
    %11 = vector.extract_strided_slice %2 {offsets = [16, 0], sizes = [8, 32], strides = [1, 1]} : vector<64x32xf32> to vector<8x32xf32>
    %cst_5 = arith.constant dense<0.000000e+00> : vector<8x32xf32>
    %12 = tpu.matmul %9, %3, %cst_5 {dimension_numbers = #tpu.dot_dimension_numbers<[1], [0], [0], [1], [0, 0, 1, 1], [], []>} : vector<8x32xf32>, vector<32x32xf32>, vector<8x32xf32> -> vector<8x32xf32>
    %13 = arith.addf %11, %12 : vector<8x32xf32>
    %14 = math.tanh %13 : vector<8x32xf32>
    %15 = arith.addf %10, %14 : vector<8x32xf32>
    %16 = vector.extract_strided_slice %2 {offsets = [24, 0], sizes = [8, 32], strides = [1, 1]} : vector<64x32xf32> to vector<8x32xf32>
    %cst_6 = arith.constant dense<0.000000e+00> : vector<8x32xf32>
    %17 = tpu.matmul %14, %3, %cst_6 {dimension_numbers = #tpu.dot_dimension_numbers<[1], [0], [0], [1], [0, 0, 1, 1], [], []>} : vector<8x32xf32>, vector<32x32xf32>, vector<8x32xf32> -> vector<8x32xf32>
    %18 = arith.addf %16, %17 : vector<8x32xf32>
    %19 = math.tanh %18 : vector<8x32xf32>
    %20 = arith.addf %15, %19 : vector<8x32xf32>
    %21 = vector.extract_strided_slice %2 {offsets = [32, 0], sizes = [8, 32], strides = [1, 1]} : vector<64x32xf32> to vector<8x32xf32>
    %cst_7 = arith.constant dense<0.000000e+00> : vector<8x32xf32>
    %22 = tpu.matmul %19, %3, %cst_7 {dimension_numbers = #tpu.dot_dimension_numbers<[1], [0], [0], [1], [0, 0, 1, 1], [], []>} : vector<8x32xf32>, vector<32x32xf32>, vector<8x32xf32> -> vector<8x32xf32>
    %23 = arith.addf %21, %22 : vector<8x32xf32>
    %24 = math.tanh %23 : vector<8x32xf32>
    %25 = arith.addf %20, %24 : vector<8x32xf32>
    %26 = vector.extract_strided_slice %2 {offsets = [40, 0], sizes = [8, 32], strides = [1, 1]} : vector<64x32xf32> to vector<8x32xf32>
    %cst_8 = arith.constant dense<0.000000e+00> : vector<8x32xf32>
    %27 = tpu.matmul %24, %3, %cst_8 {dimension_numbers = #tpu.dot_dimension_numbers<[1], [0], [0], [1], [0, 0, 1, 1], [], []>} : vector<8x32xf32>, vector<32x32xf32>, vector<8x32xf32> -> vector<8x32xf32>
    %28 = arith.addf %26, %27 : vector<8x32xf32>
    %29 = math.tanh %28 : vector<8x32xf32>
    %30 = arith.addf %25, %29 : vector<8x32xf32>
    %31 = vector.extract_strided_slice %2 {offsets = [48, 0], sizes = [8, 32], strides = [1, 1]} : vector<64x32xf32> to vector<8x32xf32>
    %cst_9 = arith.constant dense<0.000000e+00> : vector<8x32xf32>
    %32 = tpu.matmul %29, %3, %cst_9 {dimension_numbers = #tpu.dot_dimension_numbers<[1], [0], [0], [1], [0, 0, 1, 1], [], []>} : vector<8x32xf32>, vector<32x32xf32>, vector<8x32xf32> -> vector<8x32xf32>
    %33 = arith.addf %31, %32 : vector<8x32xf32>
    %34 = math.tanh %33 : vector<8x32xf32>
    %35 = arith.addf %30, %34 : vector<8x32xf32>
    %36 = vector.extract_strided_slice %2 {offsets = [56, 0], sizes = [8, 32], strides = [1, 1]} : vector<64x32xf32> to vector<8x32xf32>
    %cst_10 = arith.constant dense<0.000000e+00> : vector<8x32xf32>
    %37 = tpu.matmul %34, %3, %cst_10 {dimension_numbers = #tpu.dot_dimension_numbers<[1], [0], [0], [1], [0, 0, 1, 1], [], []>} : vector<8x32xf32>, vector<32x32xf32>, vector<8x32xf32> -> vector<8x32xf32>
    %38 = arith.addf %36, %37 : vector<8x32xf32>
    %39 = math.tanh %38 : vector<8x32xf32>
    %40 = arith.addf %35, %39 : vector<8x32xf32>
    %c64 = arith.constant 64 : index
    %c0_11 = arith.constant 0 : index
    %41 = vector.load %arg1[%c64, %c0_11] : memref<104x32xf32, #tpu.memory_space<vmem>>, vector<32x32xf32>
    %cst_12 = arith.constant dense<0.000000e+00> : vector<8x32xf32>
    %42 = tpu.matmul %40, %41, %cst_12 {dimension_numbers = #tpu.dot_dimension_numbers<[1], [0], [0], [1], [0, 0, 1, 1], [], []>} : vector<8x32xf32>, vector<32x32xf32>, vector<8x32xf32> -> vector<8x32xf32>
    %c96 = arith.constant 96 : index
    %c0_13 = arith.constant 0 : index
    %43 = vector.load %arg1[%c96, %c0_13] : memref<104x32xf32, #tpu.memory_space<vmem>>, vector<1x32xf32>
    %44 = vector.broadcast %43 : vector<1x32xf32> to vector<8x32xf32>
    %45 = arith.addf %42, %44 : vector<8x32xf32>
    %cst_14 = arith.constant dense<0xFF800000> : vector<8xf32>
    %46 = vector.multi_reduction <maximumf>, %45, %cst_14 [1] : vector<8x32xf32> to vector<8xf32>
    %47 = vector.shape_cast %46 : vector<8xf32> to vector<8x1xf32>
    %48 = vector.broadcast %47 : vector<8x1xf32> to vector<8x32xf32>
    %49 = arith.subf %45, %48 : vector<8x32xf32>
    %50 = math.exp %49 : vector<8x32xf32>
    %cst_15 = arith.constant dense<0.000000e+00> : vector<8xf32>
    %51 = vector.multi_reduction <add>, %50, %cst_15 [1] : vector<8x32xf32> to vector<8xf32>
    %52 = vector.shape_cast %51 : vector<8xf32> to vector<8x1xf32>
    %53 = tpu.reciprocal %52 {approx = true} : vector<8x1xf32> -> vector<8x1xf32>
    %54 = vector.broadcast %53 : vector<8x1xf32> to vector<8x32xf32>
    %55 = arith.mulf %50, %54 : vector<8x32xf32>
    %56 = vector.extract_strided_slice %55 {offsets = [0, 0], sizes = [2, 5], strides = [1, 1]} : vector<8x32xf32> to vector<2x5xf32>
    %c0_16 = arith.constant 0 : index
    %c0_17 = arith.constant 0 : index
    %57 = vector.load %arg2[%c0_16, %c0_17] : memref<2x5xf32, #tpu.memory_space<vmem>>, vector<2x5xf32>
    tpu.vector_store %arg2[%c0_16, %c0_17], %56 {strides = array<i32>} : memref<2x5xf32, #tpu.memory_space<vmem>>, vector<2x5xf32>,
    return
  }
}

</mosaic_0001>

<llo_original>
// kernel: tpu_custom_call.1
$region0: #{tpu_custom_call.1}
  #allocation0 [shape = 'u32[]', space=smem, size = 0x4, offset = 0x4, fixed_abs, tag = 'smem constant byte address 0x4 - core index']
  #allocation1 [shape = 'u32[144,128]{1,0:T(1,128)}', space=vmem, size = 0x12000, scoped, tag = 'internal scratch']
  %s0 = inlined_call_operand.vmem [shape: f32[64,32], index: 0, kind: input, shape index: {}]
  %s1 = inlined_call_operand.vmem [shape: f32[104,32], index: 1, kind: input, shape index: {}]
  %s2 = inlined_call_operand.hbm [shape: f32[2,5], index: 2, kind: output, shape index: {}]
  %s3 = sld [smem:[#allocation0]]
  $region18: #{tpu_custom_call.1} parent=0
    _
  %s5 = ssub.s32 1, %s3
  %s6 = scalar_select 0, %s5, %s3
  $region1: #{tpu_custom_call.1} parent=0
    #allocation2 [shape = 'u8[1024]{0}', space=vmem, size = 0x400, scoped, tag = 'output window, operand 0, single buffered']
    #allocation3 [shape = 's32[1]{0}', space=sflag, size = 0x4, scoped, tag = 'scoped memory for tpu_custom_call.1']
    %7 = vsyncpa [#allocation3], 0
    // Predicated region
    $region2: #{tpu_custom_call.1} parent=1 // pred_check
      _
    $region3: #{tpu_custom_call.1} parent=1 // pred_check_branch
      %9 = sbr.rel (0) target = $region5
    $region4: #{tpu_custom_call.1} parent=1 // pred_region
      _
    $region5: #{tpu_custom_call.1} parent=1 // pred_fallthru
      _
    // Predicated region
    $region6: #{tpu_custom_call.1} parent=1 // pred_check
      _
    $region7: #{tpu_custom_call.1} parent=1 // pred_check_branch
      %11 = sbr.rel (0) target = $region9
    $region8: #{tpu_custom_call.1} parent=1 // pred_region
      _
    $region9: #{tpu_custom_call.1} parent=1 // pred_fallthru
      _
    %v12 = vld [vmem:[%s0] sm:$0xff]
    %v13 = vld [vmem:[%s0 + $0x8] sm:$0xff]
    %v14 = vld [vmem:[%s0 + $0x10] sm:$0xff]
    %v15 = vld [vmem:[%s0 + $0x18] sm:$0xff]
    %v16 = vld [vmem:[%s0 + $0x20] sm:$0xff]
    %v17 = vld [vmem:[%s0 + $0x28] sm:$0xff]
    %v18 = vld [vmem:[%s0 + $0x30] sm:$0xff]
    %v19 = vld [vmem:[%s0 + $0x38] sm:$0xff]
    %v20 = vld [vmem:[%s1] sm:$0xff]
    %v21 = vld [vmem:[%s1 + $0x8] sm:$0xff]
    %v22 = vld [vmem:[%s1 + $0x10] sm:$0xff]
    %v23 = vld [vmem:[%s1 + $0x18] sm:$0xff]
    %vm24 = vcmask 261120
    %v26 = vsel %vm24, %v12, 0
    %v29 = vsel %vm24, %v13, 0
    %v32 = vsel %vm24, %v14, 0
    %v35 = vsel %vm24, %v15, 0
    %v38 = vsel %vm24, %v16, 0
    %v41 = vsel %vm24, %v17, 0
    %v44 = vsel %vm24, %v18, 0
    %v47 = vsel %vm24, %v19, 0
    %49 = vmatprep.subr.mxu0 0.0
    %50 = vmatpush1.msra.mxu0 %v20
    %51 = vmatprep.subr.mxu0 0.0
    %52 = vmatpush1.msra.mxu0 %v21
    %53 = vmatprep.subr.mxu0 0.0
    %54 = vmatpush1.msra.mxu0 %v22
    %55 = vmatprep.subr.mxu0 0.0
    %56 = vmatpush1.msra.mxu0 %v23
    %57 = vmatprep.subr.mxu0 0.0
    %58 = vmatpush1.msra.mxu0 0.0
    %59 = vmatprep.subr.mxu0 0.0
    %60 = vmatpush1.msra.mxu0 0.0
    %61 = vmatprep.subr.mxu0 0.0
    %62 = vmatpush1.msra.mxu0 0.0
    %63 = vmatprep.subr.mxu0 0.0
    %64 = vmatpush1.msra.mxu0 0.0
    %65 = vmatprep.subr.mxu0 0.0
    %66 = vmatpush1.msra.mxu0 0.0
    %67 = vmatprep.subr.mxu0 0.0
    %68 = vmatpush1.msra.mxu0 0.0
    %69 = vmatprep.subr.mxu0 0.0
    %70 = vmatpush1.msra.mxu0 0.0
    %71 = vmatprep.subr.mxu0 0.0
    %72 = vmatpush1.msra.mxu0 0.0
    %73 = vmatprep.subr.mxu0 0.0
    %74 = vmatpush1.msra.mxu0 0.0
    %75 = vmatprep.subr.mxu0 0.0
    %76 = vmatpush1.msra.mxu0 0.0
    %77 = vmatprep.subr.mxu0 0.0
    %78 = vmatpush1.msra.mxu0 0.0
    %79 = vmatprep.subr.mxu0 0.0
    %80 = vmatpush1.msra.mxu0 0.0
    %81 = vmatprep.subr.mxu0 0.0
    %82 = vmatpush1.msra.mxu0 0.0
    %83 = vmatprep.subr.mxu0 0.0
    %84 = vmatpush1.msra.mxu0 0.0
    %85 = vmatprep.subr.mxu0 0.0
    %86 = vmatpush1.msra.mxu0 0.0
    %87 = vmatprep.subr.mxu0 0.0
    %88 = vmatpush1.msra.mxu0 0.0
    %89 = vmatprep.subr.mxu0 0.0
    %90 = vmatpush1.msra.mxu0 0.0
    %91 = vmatprep.subr.mxu0 0.0
    %92 = vmatpush1.msra.mxu0 0.0
    %93 = vmatprep.subr.mxu0 0.0
    %94 = vmatpush1.msra.mxu0 0.0
    %95 = vmatprep.subr.mxu0 0.0
    %96 = vmatpush1.msra.mxu0 0.0
    %97 = vmatprep.subr.mxu0 0.0
    %98 = vmatpush1.msra.mxu0 0.0
    %99 = vmatprep.subr.mxu0 0.0
    %100 = vmatpush1.msra.mxu0 0.0
    %101 = vmatprep.subr.mxu0 0.0
    %102 = vmatpush1.msra.mxu0 0.0
    %103 = vmatprep.subr.mxu0 0.0
    %104 = vmatpush1.msra.mxu0 0.0
    %105 = vmatprep.subr.mxu0 0.0
    %106 = vmatpush1.msra.mxu0 0.0
    %107 = vmatprep.subr.mxu0 0.0
    %108 = vmatpush1.msra.mxu0 0.0
    %109 = vmatprep.subr.mxu0 0.0
    %110 = vmatpush1.msra.mxu0 0.0
    %111 = vmatprep.subr.mxu0 0.0
    %112 = vmatpush1.msra.mxu0 0.0
    %113 = vmatprep.mubr.f32.mxu0 0.0
    %114 = vmatmul.mubr.f32.gmra.mrb[0].mxu0 %v26
    %v115 = vpop.f32.mrb[0].mxu0
    %v116 = vadd.f32 0.0, %v115
    %v117 = vpop.f32.mrb[0].mxu0
    %118 = vmatprep.mubr.f32.mxu0 0.0
    %119 = vmatmul.mubr.f32.gmra.mrb[0].mxu0 %v29
    %v120 = vpop.f32.mrb[0].mxu0
    %v121 = vadd.f32 0.0, %v120
    %v122 = vpop.f32.mrb[0].mxu0
    %123 = vmatprep.mubr.f32.mxu0 0.0
    %124 = vmatmul.mubr.f32.gmra.mrb[0].mxu0 %v32
    %v125 = vpop.f32.mrb[0].mxu0
    %v126 = vadd.f32 0.0, %v125
    %v127 = vpop.f32.mrb[0].mxu0
    %128 = vmatprep.mubr.f32.mxu0 0.0
    %129 = vmatmul.mubr.f32.gmra.mrb[0].mxu0 %v35
    %v130 = vpop.f32.mrb[0].mxu0
    %v131 = vadd.f32 0.0, %v130
    %v132 = vpop.f32.mrb[0].mxu0
    %133 = vmatprep.mubr.f32.mxu0 0.0
    %134 = vmatmul.mubr.f32.gmra.mrb[0].mxu0 %v38
    %v135 = vpop.f32.mrb[0].mxu0
    %v136 = vadd.f32 0.0, %v135
    %v137 = vpop.f32.mrb[0].mxu0
    %138 = vmatprep.mubr.f32.mxu0 0.0
    %139 = vmatmul.mubr.f32.gmra.mrb[0].mxu0 %v41
    %v140 = vpop.f32.mrb[0].mxu0
    %v141 = vadd.f32 0.0, %v140
    %v142 = vpop.f32.mrb[0].mxu0
    %143 = vmatprep.mubr.f32.mxu0 0.0
    %144 = vmatmul.mubr.f32.gmra.mrb[0].mxu0 %v44
    %v145 = vpop.f32.mrb[0].mxu0
    %v146 = vadd.f32 0.0, %v145
    %v147 = vpop.f32.mrb[0].mxu0
    %148 = vmatprep.mubr.f32.mxu0 0.0
    %149 = vmatmul.mubr.f32.gmra.mrb[0].mxu0 %v47
    %v150 = vpop.f32.mrb[0].mxu0
    %v151 = vadd.f32 0.0, %v150
    %v152 = vpop.f32.mrb[0].mxu0
    %153 = vdwg.mxu0
    %v154 = vld [vmem:[%s1 + $0x20] sm:$0xff]
    %v155 = vld [vmem:[%s1 + $0x28] sm:$0xff]
    %v156 = vld [vmem:[%s1 + $0x30] sm:$0xff]
    %v157 = vld [vmem:[%s1 + $0x38] sm:$0xff]
    %v158 = vtanh.pop %v116
    %v160 = vsel %vm24, %v158, 0
    %162 = vmatprep.subr.mxu0 0.0
    %163 = vmatpush1.msra.mxu0 %v154
    %164 = vmatprep.subr.mxu0 0.0
    %165 = vmatpush1.msra.mxu0 %v155
    %166 = vmatprep.subr.mxu0 0.0
    %167 = vmatpush1.msra.mxu0 %v156
    %168 = vmatprep.subr.mxu0 0.0
    %169 = vmatpush1.msra.mxu0 %v157
    %170 = vmatprep.subr.mxu0 0.0
    %171 = vmatpush1.msra.mxu0 0.0
    %172 = vmatprep.subr.mxu0 0.0
    %173 = vmatpush1.msra.mxu0 0.0
    %174 = vmatprep.subr.mxu0 0.0
    %175 = vmatpush1.msra.mxu0 0.0
    %176 = vmatprep.subr.mxu0 0.0
    %177 = vmatpush1.msra.mxu0 0.0
    %178 = vmatprep.subr.mxu0 0.0
    %179 = vmatpush1.msra.mxu0 0.0
    %180 = vmatprep.subr.mxu0 0.0
    %181 = vmatpush1.msra.mxu0 0.0
    %182 = vmatprep.subr.mxu0 0.0
    %183 = vmatpush1.msra.mxu0 0.0
    %184 = vmatprep.subr.mxu0 0.0
    %185 = vmatpush1.msra.mxu0 0.0
    %186 = vmatprep.subr.mxu0 0.0
    %187 = vmatpush1.msra.mxu0 0.0
    %188 = vmatprep.subr.mxu0 0.0
    %189 = vmatpush1.msra.mxu0 0.0
    %190 = vmatprep.subr.mxu0 0.0
    %191 = vmatpush1.msra.mxu0 0.0
    %192 = vmatprep.subr.mxu0 0.0
    %193 = vmatpush1.msra.mxu0 0.0
    %194 = vmatprep.subr.mxu0 0.0
    %195 = vmatpush1.msra.mxu0 0.0
    %196 = vmatprep.subr.mxu0 0.0
    %197 = vmatpush1.msra.mxu0 0.0
    %198 = vmatprep.subr.mxu0 0.0
    %199 = vmatpush1.msra.mxu0 0.0
    %200 = vmatprep.subr.mxu0 0.0
    %201 = vmatpush1.msra.mxu0 0.0
    %202 = vmatprep.subr.mxu0 0.0
    %203 = vmatpush1.msra.mxu0 0.0
    %204 = vmatprep.subr.mxu0 0.0
    %205 = vmatpush1.msra.mxu0 0.0
    %206 = vmatprep.subr.mxu0 0.0
    %207 = vmatpush1.msra.mxu0 0.0
    %208 = vmatprep.subr.mxu0 0.0
    %209 = vmatpush1.msra.mxu0 0.0
    %210 = vmatprep.subr.mxu0 0.0
    %211 = vmatpush1.msra.mxu0 0.0
    %212 = vmatprep.subr.mxu0 0.0
    %213 = vmatpush1.msra.mxu0 0.0
    %214 = vmatprep.subr.mxu0 0.0
    %215 = vmatpush1.msra.mxu0 0.0
    %216 = vmatprep.subr.mxu0 0.0
    %217 = vmatpush1.msra.mxu0 0.0
    %218 = vmatprep.subr.mxu0 0.0
    %219 = vmatpush1.msra.mxu0 0.0
    %220 = vmatprep.subr.mxu0 0.0
    %221 = vmatpush1.msra.mxu0 0.0
    %222 = vmatprep.subr.mxu0 0.0
    %223 = vmatpush1.msra.mxu0 0.0
    %224 = vmatprep.subr.mxu0 0.0
    %225 = vmatpush1.msra.mxu0 0.0
    %226 = vmatprep.mubr.f32.mxu0 0.0
    %227 = vmatmul.mubr.f32.gmra.mrb[0].mxu0 %v160
    %v228 = vpop.f32.mrb[0].mxu0
    %v229 = vadd.f32 0.0, %v228
    %v230 = vpop.f32.mrb[0].mxu0
    %231 = vdwg.mxu0
    %v232 = vadd.f32 %v121, %v229
    %v233 = vtanh.pop %v232
    %v234 = vadd.f32 %v158, %v233
    %v236 = vsel %vm24, %v233, 0
    %238 = vmatprep.subr.mxu0 0.0
    %239 = vmatpush1.msra.mxu0 %v154
    %240 = vmatprep.subr.mxu0 0.0
    %241 = vmatpush1.msra.mxu0 %v155
    %242 = vmatprep.subr.mxu0 0.0
    %243 = vmatpush1.msra.mxu0 %v156
    %244 = vmatprep.subr.mxu0 0.0
    %245 = vmatpush1.msra.mxu0 %v157
    %246 = vmatprep.subr.mxu0 0.0
    %247 = vmatpush1.msra.mxu0 0.0
    %248 = vmatprep.subr.mxu0 0.0
    %249 = vmatpush1.msra.mxu0 0.0
    %250 = vmatprep.subr.mxu0 0.0
    %251 = vmatpush1.msra.mxu0 0.0
    %252 = vmatprep.subr.mxu0 0.0
    %253 = vmatpush1.msra.mxu0 0.0
    %254 = vmatprep.subr.mxu0 0.0
    %255 = vmatpush1.msra.mxu0 0.0
    %256 = vmatprep.subr.mxu0 0.0
    %257 = vmatpush1.msra.mxu0 0.0
    %258 = vmatprep.subr.mxu0 0.0
    %259 = vmatpush1.msra.mxu0 0.0
    %260 = vmatprep.subr.mxu0 0.0
    %261 = vmatpush1.msra.mxu0 0.0
    %262 = vmatprep.subr.mxu0 0.0
    %263 = vmatpush1.msra.mxu0 0.0
    %264 = vmatprep.subr.mxu0 0.0
    %265 = vmatpush1.msra.mxu0 0.0
    %266 = vmatprep.subr.mxu0 0.0
    %267 = vmatpush1.msra.mxu0 0.0
    %268 = vmatprep.subr.mxu0 0.0
    %269 = vmatpush1.msra.mxu0 0.0
    %270 = vmatprep.subr.mxu0 0.0
    %271 = vmatpush1.msra.mxu0 0.0
    %272 = vmatprep.subr.mxu0 0.0
    %273 = vmatpush1.msra.mxu0 0.0
    %274 = vmatprep.subr.mxu0 0.0
    %275 = vmatpush1.msra.mxu0 0.0
    %276 = vmatprep.subr.mxu0 0.0
    %277 = vmatpush1.msra.mxu0 0.0
    %278 = vmatprep.subr.mxu0 0.0
    %279 = vmatpush1.msra.mxu0 0.0
    %280 = vmatprep.subr.mxu0 0.0
    %281 = vmatpush1.msra.mxu0 0.0
    %282 = vmatprep.subr.mxu0 0.0
    %283 = vmatpush1.msra.mxu0 0.0
    %284 = vmatprep.subr.mxu0 0.0
    %285 = vmatpush1.msra.mxu0 0.0
    %286 = vmatprep.subr.mxu0 0.0
    %287 = vmatpush1.msra.mxu0 0.0
    %288 = vmatprep.subr.mxu0 0.0
    %289 = vmatpush1.msra.mxu0 0.0
    %290 = vmatprep.subr.mxu0 0.0
    %291 = vmatpush1.msra.mxu0 0.0
    %292 = vmatprep.subr.mxu0 0.0
    %293 = vmatpush1.msra.mxu0 0.0
    %294 = vmatprep.subr.mxu0 0.0
    %295 = vmatpush1.msra.mxu0 0.0
    %296 = vmatprep.subr.mxu0 0.0
    %297 = vmatpush1.msra.mxu0 0.0
    %298 = vmatprep.subr.mxu0 0.0
    %299 = vmatpush1.msra.mxu0 0.0
    %300 = vmatprep.subr.mxu0 0.0
    %301 = vmatpush1.msra.mxu0 0.0
    %302 = vmatprep.mubr.f32.mxu0 0.0
    %303 = vmatmul.mubr.f32.gmra.mrb[0].mxu0 %v236
    %v304 = vpop.f32.mrb[0].mxu0
    %v305 = vadd.f32 0.0, %v304
    %v306 = vpop.f32.mrb[0].mxu0
    %307 = vdwg.mxu0
    %v308 = vadd.f32 %v126, %v305
    %v309 = vtanh.pop %v308
    %v310 = vadd.f32 %v234, %v309
    %v312 = vsel %vm24, %v309, 0
    %314 = vmatprep.subr.mxu0 0.0
    %315 = vmatpush1.msra.mxu0 %v154
    %316 = vmatprep.subr.mxu0 0.0
    %317 = vmatpush1.msra.mxu0 %v155
    %318 = vmatprep.subr.mxu0 0.0
    %319 = vmatpush1.msra.mxu0 %v156
    %320 = vmatprep.subr.mxu0 0.0
    %321 = vmatpush1.msra.mxu0 %v157
    %322 = vmatprep.subr.mxu0 0.0
    %323 = vmatpush1.msra.mxu0 0.0
    %324 = vmatprep.subr.mxu0 0.0
    %325 = vmatpush1.msra.mxu0 0.0
    %326 = vmatprep.subr.mxu0 0.0
    %327 = vmatpush1.msra.mxu0 0.0
    %328 = vmatprep.subr.mxu0 0.0
    %329 = vmatpush1.msra.mxu0 0.0
    %330 = vmatprep.subr.mxu0 0.0
    %331 = vmatpush1.msra.mxu0 0.0
    %332 = vmatprep.subr.mxu0 0.0
    %333 = vmatpush1.msra.mxu0 0.0
    %334 = vmatprep.subr.mxu0 0.0
    %335 = vmatpush1.msra.mxu0 0.0
    %336 = vmatprep.subr.mxu0 0.0
    %337 = vmatpush1.msra.mxu0 0.0
    %338 = vmatprep.subr.mxu0 0.0
    %339 = vmatpush1.msra.mxu0 0.0
    %340 = vmatprep.subr.mxu0 0.0
    %341 = vmatpush1.msra.mxu0 0.0
    %342 = vmatprep.subr.mxu0 0.0
    %343 = vmatpush1.msra.mxu0 0.0
    %344 = vmatprep.subr.mxu0 0.0
    %345 = vmatpush1.msra.mxu0 0.0
    %346 = vmatprep.subr.mxu0 0.0
    %347 = vmatpush1.msra.mxu0 0.0
    %348 = vmatprep.subr.mxu0 0.0
    %349 = vmatpush1.msra.mxu0 0.0
    %350 = vmatprep.subr.mxu0 0.0
    %351 = vmatpush1.msra.mxu0 0.0
    %352 = vmatprep.subr.mxu0 0.0
    %353 = vmatpush1.msra.mxu0 0.0
    %354 = vmatprep.subr.mxu0 0.0
    %355 = vmatpush1.msra.mxu0 0.0
    %356 = vmatprep.subr.mxu0 0.0
    %357 = vmatpush1.msra.mxu0 0.0
    %358 = vmatprep.subr.mxu0 0.0
    %359 = vmatpush1.msra.mxu0 0.0
    %360 = vmatprep.subr.mxu0 0.0
    %361 = vmatpush1.msra.mxu0 0.0
    %362 = vmatprep.subr.mxu0 0.0
    %363 = vmatpush1.msra.mxu0 0.0
    %364 = vmatprep.subr.mxu0 0.0
    %365 = vmatpush1.msra.mxu0 0.0
    %366 = vmatprep.subr.mxu0 0.0
    %367 = vmatpush1.msra.mxu0 0.0
    %368 = vmatprep.subr.mxu0 0.0
    %369 = vmatpush1.msra.mxu0 0.0
    %370 = vmatprep.subr.mxu0 0.0
    %371 = vmatpush1.msra.mxu0 0.0
    %372 = vmatprep.subr.mxu0 0.0
    %373 = vmatpush1.msra.mxu0 0.0
    %374 = vmatprep.subr.mxu0 0.0
    %375 = vmatpush1.msra.mxu0 0.0
    %376 = vmatprep.subr.mxu0 0.0
    %377 = vmatpush1.msra.mxu0 0.0
    %378 = vmatprep.mubr.f32.mxu0 0.0
    %379 = vmatmul.mubr.f32.gmra.mrb[0].mxu0 %v312
    %v380 = vpop.f32.mrb[0].mxu0
    %v381 = vadd.f32 0.0, %v380
    %v382 = vpop.f32.mrb[0].mxu0
    %383 = vdwg.mxu0
    %v384 = vadd.f32 %v131, %v381
    %v385 = vtanh.pop %v384
    %v386 = vadd.f32 %v310, %v385
    %v388 = vsel %vm24, %v385, 0
    %390 = vmatprep.subr.mxu0 0.0
    %391 = vmatpush1.msra.mxu0 %v154
    %392 = vmatprep.subr.mxu0 0.0
    %393 = vmatpush1.msra.mxu0 %v155
    %394 = vmatprep.subr.mxu0 0.0
    %395 = vmatpush1.msra.mxu0 %v156
    %396 = vmatprep.subr.mxu0 0.0
    %397 = vmatpush1.msra.mxu0 %v157
    %398 = vmatprep.subr.mxu0 0.0
    %399 = vmatpush1.msra.mxu0 0.0
    %400 = vmatprep.subr.mxu0 0.0
    %401 = vmatpush1.msra.mxu0 0.0
    %402 = vmatprep.subr.mxu0 0.0
    %403 = vmatpush1.msra.mxu0 0.0
    %404 = vmatprep.subr.mxu0 0.0
    %405 = vmatpush1.msra.mxu0 0.0
    %406 = vmatprep.subr.mxu0 0.0
    %407 = vmatpush1.msra.mxu0 0.0
    %408 = vmatprep.subr.mxu0 0.0
    %409 = vmatpush1.msra.mxu0 0.0
    %410 = vmatprep.subr.mxu0 0.0
    %411 = vmatpush1.msra.mxu0 0.0
    %412 = vmatprep.subr.mxu0 0.0
    %413 = vmatpush1.msra.mxu0 0.0
    %414 = vmatprep.subr.mxu0 0.0
    %415 = vmatpush1.msra.mxu0 0.0
    %416 = vmatprep.subr.mxu0 0.0
    %417 = vmatpush1.msra.mxu0 0.0
    %418 = vmatprep.subr.mxu0 0.0
    %419 = vmatpush1.msra.mxu0 0.0
    %420 = vmatprep.subr.mxu0 0.0
    %421 = vmatpush1.msra.mxu0 0.0
    %422 = vmatprep.subr.mxu0 0.0
    %423 = vmatpush1.msra.mxu0 0.0
    %424 = vmatprep.subr.mxu0 0.0
    %425 = vmatpush1.msra.mxu0 0.0
    %426 = vmatprep.subr.mxu0 0.0
    %427 = vmatpush1.msra.mxu0 0.0
    %428 = vmatprep.subr.mxu0 0.0
    %429 = vmatpush1.msra.mxu0 0.0
    %430 = vmatprep.subr.mxu0 0.0
    %431 = vmatpush1.msra.mxu0 0.0
    %432 = vmatprep.subr.mxu0 0.0
    %433 = vmatpush1.msra.mxu0 0.0
    %434 = vmatprep.subr.mxu0 0.0
    %435 = vmatpush1.msra.mxu0 0.0
    %436 = vmatprep.subr.mxu0 0.0
    %437 = vmatpush1.msra.mxu0 0.0
    %438 = vmatprep.subr.mxu0 0.0
    %439 = vmatpush1.msra.mxu0 0.0
    %440 = vmatprep.subr.mxu0 0.0
    %441 = vmatpush1.msra.mxu0 0.0
    %442 = vmatprep.subr.mxu0 0.0
    %443 = vmatpush1.msra.mxu0 0.0
    %444 = vmatprep.subr.mxu0 0.0
    %445 = vmatpush1.msra.mxu0 0.0
    %446 = vmatprep.subr.mxu0 0.0
    %447 = vmatpush1.msra.mxu0 0.0
    %448 = vmatprep.subr.mxu0 0.0
    %449 = vmatpush1.msra.mxu0 0.0
    %450 = vmatprep.subr.mxu0 0.0
    %451 = vmatpush1.msra.mxu0 0.0
    %452 = vmatprep.subr.mxu0 0.0
    %453 = vmatpush1.msra.mxu0 0.0
    %454 = vmatprep.mubr.f32.mxu0 0.0
    %455 = vmatmul.mubr.f32.gmra.mrb[0].mxu0 %v388
    %v456 = vpop.f32.mrb[0].mxu0
    %v457 = vadd.f32 0.0, %v456
    %v458 = vpop.f32.mrb[0].mxu0
    %459 = vdwg.mxu0
    %v460 = vadd.f32 %v136, %v457
    %v461 = vtanh.pop %v460
    %v462 = vadd.f32 %v386, %v461
    %v464 = vsel %vm24, %v461, 0
    %466 = vmatprep.subr.mxu0 0.0
    %467 = vmatpush1.msra.mxu0 %v154
    %468 = vmatprep.subr.mxu0 0.0
    %469 = vmatpush1.msra.mxu0 %v155
    %470 = vmatprep.subr.mxu0 0.0
    %471 = vmatpush1.msra.mxu0 %v156
    %472 = vmatprep.subr.mxu0 0.0
    %473 = vmatpush1.msra.mxu0 %v157
    %474 = vmatprep.subr.mxu0 0.0
    %475 = vmatpush1.msra.mxu0 0.0
    %476 = vmatprep.subr.mxu0 0.0
    %477 = vmatpush1.msra.mxu0 0.0
    %478 = vmatprep.subr.mxu0 0.0
    %479 = vmatpush1.msra.mxu0 0.0
    %480 = vmatprep.subr.mxu0 0.0
    %481 = vmatpush1.msra.mxu0 0.0
    %482 = vmatprep.subr.mxu0 0.0
    %483 = vmatpush1.msra.mxu0 0.0
    %484 = vmatprep.subr.mxu0 0.0
    %485 = vmatpush1.msra.mxu0 0.0
    %486 = vmatprep.subr.mxu0 0.0
    %487 = vmatpush1.msra.mxu0 0.0
    %488 = vmatprep.subr.mxu0 0.0
    %489 = vmatpush1.msra.mxu0 0.0
    %490 = vmatprep.subr.mxu0 0.0
    %491 = vmatpush1.msra.mxu0 0.0
    %492 = vmatprep.subr.mxu0 0.0
    %493 = vmatpush1.msra.mxu0 0.0
    %494 = vmatprep.subr.mxu0 0.0
    %495 = vmatpush1.msra.mxu0 0.0
    %496 = vmatprep.subr.mxu0 0.0
    %497 = vmatpush1.msra.mxu0 0.0
    %498 = vmatprep.subr.mxu0 0.0
    %499 = vmatpush1.msra.mxu0 0.0
    %500 = vmatprep.subr.mxu0 0.0
    %501 = vmatpush1.msra.mxu0 0.0
    %502 = vmatprep.subr.mxu0 0.0
    %503 = vmatpush1.msra.mxu0 0.0
    %504 = vmatprep.subr.mxu0 0.0
    %505 = vmatpush1.msra.mxu0 0.0
    %506 = vmatprep.subr.mxu0 0.0
    %507 = vmatpush1.msra.mxu0 0.0
    %508 = vmatprep.subr.mxu0 0.0
    %509 = vmatpush1.msra.mxu0 0.0
    %510 = vmatprep.subr.mxu0 0.0
    %511 = vmatpush1.msra.mxu0 0.0
    %512 = vmatprep.subr.mxu0 0.0
    %513 = vmatpush1.msra.mxu0 0.0
    %514 = vmatprep.subr.mxu0 0.0
    %515 = vmatpush1.msra.mxu0 0.0
    %516 = vmatprep.subr.mxu0 0.0
    %517 = vmatpush1.msra.mxu0 0.0
    %518 = vmatprep.subr.mxu0 0.0
    %519 = vmatpush1.msra.mxu0 0.0
    %520 = vmatprep.subr.mxu0 0.0
    %521 = vmatpush1.msra.mxu0 0.0
    %522 = vmatprep.subr.mxu0 0.0
    %523 = vmatpush1.msra.mxu0 0.0
    %524 = vmatprep.subr.mxu0 0.0
    %525 = vmatpush1.msra.mxu0 0.0
    %526 = vmatprep.subr.mxu0 0.0
    %527 = vmatpush1.msra.mxu0 0.0
    %528 = vmatprep.subr.mxu0 0.0
    %529 = vmatpush1.msra.mxu0 0.0
    %530 = vmatprep.mubr.f32.mxu0 0.0
    %531 = vmatmul.mubr.f32.gmra.mrb[0].mxu0 %v464
    %v532 = vpop.f32.mrb[0].mxu0
    %v533 = vadd.f32 0.0, %v532
    %v534 = vpop.f32.mrb[0].mxu0
    %535 = vdwg.mxu0
    %v536 = vadd.f32 %v141, %v533
    %v537 = vtanh.pop %v536
    %v538 = vadd.f32 %v462, %v537
    %v540 = vsel %vm24, %v537, 0
    %542 = vmatprep.subr.mxu0 0.0
    %543 = vmatpush1.msra.mxu0 %v154
    %544 = vmatprep.subr.mxu0 0.0
    %545 = vmatpush1.msra.mxu0 %v155
    %546 = vmatprep.subr.mxu0 0.0
    %547 = vmatpush1.msra.mxu0 %v156
    %548 = vmatprep.subr.mxu0 0.0
    %549 = vmatpush1.msra.mxu0 %v157
    %550 = vmatprep.subr.mxu0 0.0
    %551 = vmatpush1.msra.mxu0 0.0
    %552 = vmatprep.subr.mxu0 0.0
    %553 = vmatpush1.msra.mxu0 0.0
    %554 = vmatprep.subr.mxu0 0.0
    %555 = vmatpush1.msra.mxu0 0.0
    %556 = vmatprep.subr.mxu0 0.0
    %557 = vmatpush1.msra.mxu0 0.0
    %558 = vmatprep.subr.mxu0 0.0
    %559 = vmatpush1.msra.mxu0 0.0
    %560 = vmatprep.subr.mxu0 0.0
    %561 = vmatpush1.msra.mxu0 0.0
    %562 = vmatprep.subr.mxu0 0.0
    %563 = vmatpush1.msra.mxu0 0.0
    %564 = vmatprep.subr.mxu0 0.0
    %565 = vmatpush1.msra.mxu0 0.0
    %566 = vmatprep.subr.mxu0 0.0
    %567 = vmatpush1.msra.mxu0 0.0
    %568 = vmatprep.subr.mxu0 0.0
    %569 = vmatpush1.msra.mxu0 0.0
    %570 = vmatprep.subr.mxu0 0.0
    %571 = vmatpush1.msra.mxu0 0.0
    %572 = vmatprep.subr.mxu0 0.0
    %573 = vmatpush1.msra.mxu0 0.0
    %574 = vmatprep.subr.mxu0 0.0
    %575 = vmatpush1.msra.mxu0 0.0
    %576 = vmatprep.subr.mxu0 0.0
    %577 = vmatpush1.msra.mxu0 0.0
    %578 = vmatprep.subr.mxu0 0.0
    %579 = vmatpush1.msra.mxu0 0.0
    %580 = vmatprep.subr.mxu0 0.0
    %581 = vmatpush1.msra.mxu0 0.0
    %582 = vmatprep.subr.mxu0 0.0
    %583 = vmatpush1.msra.mxu0 0.0
    %584 = vmatprep.subr.mxu0 0.0
    %585 = vmatpush1.msra.mxu0 0.0
    %586 = vmatprep.subr.mxu0 0.0
    %587 = vmatpush1.msra.mxu0 0.0
    %588 = vmatprep.subr.mxu0 0.0
    %589 = vmatpush1.msra.mxu0 0.0
    %590 = vmatprep.subr.mxu0 0.0
    %591 = vmatpush1.msra.mxu0 0.0
    %592 = vmatprep.subr.mxu0 0.0
    %593 = vmatpush1.msra.mxu0 0.0
    %594 = vmatprep.subr.mxu0 0.0
    %595 = vmatpush1.msra.mxu0 0.0
    %596 = vmatprep.subr.mxu0 0.0
    %597 = vmatpush1.msra.mxu0 0.0
    %598 = vmatprep.subr.mxu0 0.0
    %599 = vmatpush1.msra.mxu0 0.0
    %600 = vmatprep.subr.mxu0 0.0
    %601 = vmatpush1.msra.mxu0 0.0
    %602 = vmatprep.subr.mxu0 0.0
    %603 = vmatpush1.msra.mxu0 0.0
    %604 = vmatprep.subr.mxu0 0.0
    %605 = vmatpush1.msra.mxu0 0.0
    %606 = vmatprep.mubr.f32.mxu0 0.0
    %607 = vmatmul.mubr.f32.gmra.mrb[0].mxu0 %v540
    %v608 = vpop.f32.mrb[0].mxu0
    %v609 = vadd.f32 0.0, %v608
    %v610 = vpop.f32.mrb[0].mxu0
    %611 = vdwg.mxu0
    %v612 = vadd.f32 %v146, %v609
    %v613 = vtanh.pop %v612
    %v614 = vadd.f32 %v538, %v613
    %v616 = vsel %vm24, %v613, 0
    %618 = vmatprep.subr.mxu0 0.0
    %619 = vmatpush1.msra.mxu0 %v154
    %620 = vmatprep.subr.mxu0 0.0
    %621 = vmatpush1.msra.mxu0 %v155
    %622 = vmatprep.subr.mxu0 0.0
    %623 = vmatpush1.msra.mxu0 %v156
    %624 = vmatprep.subr.mxu0 0.0
    %625 = vmatpush1.msra.mxu0 %v157
    %626 = vmatprep.subr.mxu0 0.0
    %627 = vmatpush1.msra.mxu0 0.0
    %628 = vmatprep.subr.mxu0 0.0
    %629 = vmatpush1.msra.mxu0 0.0
    %630 = vmatprep.subr.mxu0 0.0
    %631 = vmatpush1.msra.mxu0 0.0
    %632 = vmatprep.subr.mxu0 0.0
    %633 = vmatpush1.msra.mxu0 0.0
    %634 = vmatprep.subr.mxu0 0.0
    %635 = vmatpush1.msra.mxu0 0.0
    %636 = vmatprep.subr.mxu0 0.0
    %637 = vmatpush1.msra.mxu0 0.0
    %638 = vmatprep.subr.mxu0 0.0
    %639 = vmatpush1.msra.mxu0 0.0
    %640 = vmatprep.subr.mxu0 0.0
    %641 = vmatpush1.msra.mxu0 0.0
    %642 = vmatprep.subr.mxu0 0.0
    %643 = vmatpush1.msra.mxu0 0.0
    %644 = vmatprep.subr.mxu0 0.0
    %645 = vmatpush1.msra.mxu0 0.0
    %646 = vmatprep.subr.mxu0 0.0
    %647 = vmatpush1.msra.mxu0 0.0
    %648 = vmatprep.subr.mxu0 0.0
    %649 = vmatpush1.msra.mxu0 0.0
    %650 = vmatprep.subr.mxu0 0.0
    %651 = vmatpush1.msra.mxu0 0.0
    %652 = vmatprep.subr.mxu0 0.0
    %653 = vmatpush1.msra.mxu0 0.0
    %654 = vmatprep.subr.mxu0 0.0
    %655 = vmatpush1.msra.mxu0 0.0
    %656 = vmatprep.subr.mxu0 0.0
    %657 = vmatpush1.msra.mxu0 0.0
    %658 = vmatprep.subr.mxu0 0.0
    %659 = vmatpush1.msra.mxu0 0.0
    %660 = vmatprep.subr.mxu0 0.0
    %661 = vmatpush1.msra.mxu0 0.0
    %662 = vmatprep.subr.mxu0 0.0
    %663 = vmatpush1.msra.mxu0 0.0
    %664 = vmatprep.subr.mxu0 0.0
    %665 = vmatpush1.msra.mxu0 0.0
    %666 = vmatprep.subr.mxu0 0.0
    %667 = vmatpush1.msra.mxu0 0.0
    %668 = vmatprep.subr.mxu0 0.0
    %669 = vmatpush1.msra.mxu0 0.0
    %670 = vmatprep.subr.mxu0 0.0
    %671 = vmatpush1.msra.mxu0 0.0
    %672 = vmatprep.subr.mxu0 0.0
    %673 = vmatpush1.msra.mxu0 0.0
    %674 = vmatprep.subr.mxu0 0.0
    %675 = vmatpush1.msra.mxu0 0.0
    %676 = vmatprep.subr.mxu0 0.0
    %677 = vmatpush1.msra.mxu0 0.0
    %678 = vmatprep.subr.mxu0 0.0
    %679 = vmatpush1.msra.mxu0 0.0
    %680 = vmatprep.subr.mxu0 0.0
    %681 = vmatpush1.msra.mxu0 0.0
    %682 = vmatprep.mubr.f32.mxu0 0.0
    %683 = vmatmul.mubr.f32.gmra.mrb[0].mxu0 %v616
    %v684 = vpop.f32.mrb[0].mxu0
    %v685 = vadd.f32 0.0, %v684
    %v686 = vpop.f32.mrb[0].mxu0
    %687 = vdwg.mxu0
    %v688 = vadd.f32 %v151, %v685
    %v689 = vtanh.pop %v688
    %v690 = vadd.f32 %v614, %v689
    %v691 = vld [vmem:[%s1 + $0x40] sm:$0xff]
    %v692 = vld [vmem:[%s1 + $0x48] sm:$0xff]
    %v693 = vld [vmem:[%s1 + $0x50] sm:$0xff]
    %v694 = vld [vmem:[%s1 + $0x58] sm:$0xff]
    %v695 = vld [vmem:[%s1 + $0x60] sm:$0x1]
    %v696 = vlaneseq
    %v697 = vshrl.u32 %v696, 7
    %v698 = vsub.s32 0, %v697
    %v699 = vrot.slane %v695, %v698
    %v701 = vsel %vm24, %v690, 0
    %703 = vmatprep.subr.mxu0 0.0
    %704 = vmatpush1.msra.mxu0 %v691
    %705 = vmatprep.subr.mxu0 0.0
    %706 = vmatpush1.msra.mxu0 %v692
    %707 = vmatprep.subr.mxu0 0.0
    %708 = vmatpush1.msra.mxu0 %v693
    %709 = vmatprep.subr.mxu0 0.0
    %710 = vmatpush1.msra.mxu0 %v694
    %711 = vmatprep.subr.mxu0 0.0
    %712 = vmatpush1.msra.mxu0 0.0
    %713 = vmatprep.subr.mxu0 0.0
    %714 = vmatpush1.msra.mxu0 0.0
    %715 = vmatprep.subr.mxu0 0.0
    %716 = vmatpush1.msra.mxu0 0.0
    %717 = vmatprep.subr.mxu0 0.0
    %718 = vmatpush1.msra.mxu0 0.0
    %719 = vmatprep.subr.mxu0 0.0
    %720 = vmatpush1.msra.mxu0 0.0
    %721 = vmatprep.subr.mxu0 0.0
    %722 = vmatpush1.msra.mxu0 0.0
    %723 = vmatprep.subr.mxu0 0.0
    %724 = vmatpush1.msra.mxu0 0.0
    %725 = vmatprep.subr.mxu0 0.0
    %726 = vmatpush1.msra.mxu0 0.0
    %727 = vmatprep.subr.mxu0 0.0
    %728 = vmatpush1.msra.mxu0 0.0
    %729 = vmatprep.subr.mxu0 0.0
    %730 = vmatpush1.msra.mxu0 0.0
    %731 = vmatprep.subr.mxu0 0.0
    %732 = vmatpush1.msra.mxu0 0.0
    %733 = vmatprep.subr.mxu0 0.0
    %734 = vmatpush1.msra.mxu0 0.0
    %735 = vmatprep.subr.mxu0 0.0
    %736 = vmatpush1.msra.mxu0 0.0
    %737 = vmatprep.subr.mxu0 0.0
    %738 = vmatpush1.msra.mxu0 0.0
    %739 = vmatprep.subr.mxu0 0.0
    %740 = vmatpush1.msra.mxu0 0.0
    %741 = vmatprep.subr.mxu0 0.0
    %742 = vmatpush1.msra.mxu0 0.0
    %743 = vmatprep.subr.mxu0 0.0
    %744 = vmatpush1.msra.mxu0 0.0
    %745 = vmatprep.subr.mxu0 0.0
    %746 = vmatpush1.msra.mxu0 0.0
    %747 = vmatprep.subr.mxu0 0.0
    %748 = vmatpush1.msra.mxu0 0.0
    %749 = vmatprep.subr.mxu0 0.0
    %750 = vmatpush1.msra.mxu0 0.0
    %751 = vmatprep.subr.mxu0 0.0
    %752 = vmatpush1.msra.mxu0 0.0
    %753 = vmatprep.subr.mxu0 0.0
    %754 = vmatpush1.msra.mxu0 0.0
    %755 = vmatprep.subr.mxu0 0.0
    %756 = vmatpush1.msra.mxu0 0.0
    %757 = vmatprep.subr.mxu0 0.0
    %758 = vmatpush1.msra.mxu0 0.0
    %759 = vmatprep.subr.mxu0 0.0
    %760 = vmatpush1.msra.mxu0 0.0
    %761 = vmatprep.subr.mxu0 0.0
    %762 = vmatpush1.msra.mxu0 0.0
    %763 = vmatprep.subr.mxu0 0.0
    %764 = vmatpush1.msra.mxu0 0.0
    %765 = vmatprep.subr.mxu0 0.0
    %766 = vmatpush1.msra.mxu0 0.0
    %767 = vmatprep.mubr.f32.mxu0 0.0
    %768 = vmatmul.mubr.f32.gmra.mrb[0].mxu0 %v701
    %v769 = vpop.f32.mrb[0].mxu0
    %v770 = vadd.f32 %v699, %v769
    %v771 = vpop.f32.mrb[0].mxu0
    %772 = vdwg.mxu0
    %v773 = vsel %vm24, %v770, -inf
    %774 = vmax.xlane.f32.xlu0 %v773
    %v775 = vpop.xlane.xlu0 %774
    %v776 = vsub.f32 %v770, %v775
    %v777 = vmul.f32 %v776, 1.442695
    %v778 = vpow.pop %v777
    %v779 = vsel %vm24, %v778, 0.0
    %780 = vadd.xlane.f32.xlu0 %v779
    %v781 = vpop.xlane.xlu0 %780
    %v782 = vrcp.pop %v781
    %v783 = vmul.f32 %v778, %v782
    %vm784 = vcmask 33792
    %785 = vst.msk [vmem:[#allocation2] sm:$0x3] %vm784, %v783
    // Predicated region
    $region10: #{tpu_custom_call.1} parent=1 // pred_check
      _
    $region11: #{tpu_custom_call.1} parent=1 // pred_check_branch
      %787 = sbr.rel (0) target = $region13
    $region12: #{tpu_custom_call.1} parent=1 // pred_region
      %s789 = ssub.s32 32, 32
      %790 = vsyncadd [#allocation3], %s789
      %s792 = sshll.u32 [#allocation2], 4
      %s793 = int_to_ptr.vmem [resolvable:$true] %s792
      %795 = dma.vmem_to_hbm [thread:$0]  %s793, 32, %s2, [#allocation3]
    $region13: #{tpu_custom_call.1} parent=1 // pred_fallthru
      _
    // Predicated region
    $region14: #{tpu_custom_call.1} parent=1 // pred_check
      _
    $region15: #{tpu_custom_call.1} parent=1 // pred_check_branch
      %797 = sbr.rel (0) target = $region17
    $region16: #{tpu_custom_call.1} parent=1 // pred_region
      %798 = dma.done [#allocation3], 32
    $region17: #{tpu_custom_call.1} parent=1 // pred_fallthru
      _
    %799 = vsyncpa [#allocation3], 1

</llo_original>
